<compile_context>
chip_gen: v6e
topology: v6e:2x2x1
jax: 0.10.0
libtpu: 0.0.40
codegen_flags: <defaults>
</compile_context>

<pallas_src>
import jax
import jax.numpy as jnp
from jax.experimental import pallas as pl
from jax.experimental.pallas import tpu as pltpu


def _ctgwp_kernel(w_ref, f_ref, o_ref):
    # w_ref: (1, 1, T)  normalized Gaussian weights (f32), same block each step
    # f_ref: (G, 128, T) tile of flattened (B*C) rows  (G*128 rows per step)
    # o_ref: (G, 128)    pooled outputs, lane-dense
    f = f_ref[...].astype(jnp.float32)
    w = w_ref[...]
    o_ref[...] = jnp.sum(f * w, axis=-1).astype(o_ref.dtype)


def _choose_tile_rows(n_rows, T):
    """Rows per grid step: multiple of 128 (lane-dense output), ~2 MiB/buffer."""
    n128 = ((n_rows + 127) // 128) * 128
    lanes_t = max(128, ((T + 127) // 128) * 128)   # minor dim as padded in VMEM
    budget = 2 * 1024 * 1024                       # per (double-buffered) input tile
    rows = (budget // (lanes_t * 4)) // 1024 * 1024
    rows = max(1024, min(rows, 8192))              # multiple of 1024 when gridded
    return n128 if n128 <= rows else rows


@jax.jit
def ctgwp_forward(F, sigma_param):
    """F: (B, C, T) float32/bfloat16, sigma_param: scalar. Returns (B, C)."""
    B, C, T = F.shape
    N = B * C

    # Gaussian weights: tiny O(T) op, hoisted out of the per-tile kernel body.
    sigma = jnp.abs(jnp.asarray(sigma_param, jnp.float32)) + 1e-6
    center = (T - 1) / 2.0
    t = jnp.arange(T, dtype=jnp.float32)
    w = jnp.exp(-((t - center) ** 2) / (2.0 * sigma * sigma))
    w = (w / jnp.sum(w)).reshape(1, 1, T)

    tile_rows = _choose_tile_rows(N, T)
    num_tiles = -(-N // tile_rows)                 # cdiv
    n_pad = num_tiles * tile_rows
    g = tile_rows // 128

    f2 = F.reshape(N, T)
    if n_pad != N:
        # Zero-pad the ragged last tile; padded rows pool to 0 and are sliced off.
        f2 = jnp.pad(f2, ((0, n_pad - N), (0, 0)))
    f3 = f2.reshape(n_pad // 128, 128, T)

    # TODO(synk): for very large T (tens of thousands) add a second "arbitrary"
    # grid axis over T with an f32 VMEM accumulator instead of keeping T whole.
    out = pl.pallas_call(
        _ctgwp_kernel,
        out_shape=jax.ShapeDtypeStruct((n_pad // 128, 128), F.dtype),
        grid=(num_tiles,),
        in_specs=[
            pl.BlockSpec((1, 1, T), lambda i: (0, 0, 0)),    # weights (constant)
            pl.BlockSpec((g, 128, T), lambda i: (i, 0, 0)),  # row tile
        ],
        out_specs=pl.BlockSpec((g, 128), lambda i: (i, 0)),  # lane-dense output
        compiler_params=pltpu.CompilerParams(
            dimension_semantics=("parallel",),
            vmem_limit_bytes=32 * 1024 * 1024,
        ),
    )(w, f3)

    return out.reshape(n_pad)[:N].reshape(B, C)


def ctgwp_reference(F, sigma_param):
    """Pure-JAX reference mirroring the PyTorch forward."""
    B, C, T = F.shape
    sigma = jnp.abs(jnp.asarray(sigma_param, jnp.float32)) + 1e-6
    center = (T - 1) / 2.0
    t = jnp.arange(T, dtype=jnp.float32)
    w = jnp.exp(-((t - center) ** 2) / (2.0 * sigma ** 2))
    w = w / w.sum()
    return (F * w).sum(axis=2)


if __name__ == "__main__":
    # Small shapes consistent with the module: F (B, C, T)
    B, C, T = 2, 4, 8
    key = jax.random.PRNGKey(0)
    F = jax.random.normal(key, (B, C, T), dtype=jnp.float32)

    # Deterministic parameter init, matching nn.Parameter(torch.tensor(T/4)).
    sigma_param = jnp.float32(T / 4.0)

    out = ctgwp_forward(F, sigma_param)
    jax.block_until_ready(out)

    ref = ctgwp_reference(F, sigma_param)
    assert out.shape == (B, C)
    assert jnp.allclose(out, ref, atol=1e-5, rtol=1e-5), (out, ref)

    print("KERNEL_OK")
</pallas_src>

<mosaic_0001>
module attributes {stable_mosaic.version = 11 : i64} {
  func.func @_ctgwp_kernel(%arg0: i32, %arg1: memref<1x1x8xf32, #tpu.memory_space<vmem>>, %arg2: memref<1x128x8xf32, #tpu.memory_space<vmem>>, %arg3: memref<1x128xf32, #tpu.memory_space<vmem>>) attributes {dimension_semantics = [#tpu.dimension_semantics<parallel>], iteration_bounds = array<i64: 1>, scalar_prefetch = 0 : i64, scratch_operands = 0 : i64, tpu.core_type = #tpu.core_type<tc>, window_params = [{pipeline_mode = #tpu.pipeline_mode<synchronous>, transform_indices = @transform_0, window_bounds = array<i64: 1, 1, 8>}, {transform_indices = @transform_1, window_bounds = array<i64: 1, 128, 8>}, {transform_indices = @transform_2, window_bounds = array<i64: 1, 128>}]} {
    %c0 = arith.constant 0 : index
    %c0_0 = arith.constant 0 : index
    %c0_1 = arith.constant 0 : index
    %0 = vector.load %arg2[%c0, %c0_0, %c0_1] : memref<1x128x8xf32, #tpu.memory_space<vmem>>, vector<1x128x8xf32>
    %c0_2 = arith.constant 0 : index
    %c0_3 = arith.constant 0 : index
    %c0_4 = arith.constant 0 : index
    %1 = vector.load %arg1[%c0_2, %c0_3, %c0_4] : memref<1x1x8xf32, #tpu.memory_space<vmem>>, vector<1x1x8xf32>
    %2 = vector.broadcast %1 : vector<1x1x8xf32> to vector<1x128x8xf32>
    %3 = arith.mulf %0, %2 : vector<1x128x8xf32>
    %cst = arith.constant dense<0.000000e+00> : vector<1x128xf32>
    %4 = vector.multi_reduction <add>, %3, %cst [2] : vector<1x128x8xf32> to vector<1x128xf32>
    %c0_5 = arith.constant 0 : index
    %c0_6 = arith.constant 0 : index
    %5 = vector.load %arg3[%c0_5, %c0_6] : memref<1x128xf32, #tpu.memory_space<vmem>>, vector<1x128xf32>
    tpu.vector_store %arg3[%c0_5, %c0_6], %4 {strides = array<i32>} : memref<1x128xf32, #tpu.memory_space<vmem>>, vector<1x128xf32>,
    return
  }
  func.func @transform_0(%arg0: i32) -> (i32, i32, i32) {
    %c0_i32 = arith.constant 0 : i32
    %c0_i32_0 = arith.constant 0 : i32
    %c0_i32_1 = arith.constant 0 : i32
    %c0_i32_2 = arith.constant 0 : i32
    return %c0_i32, %c0_i32_0, %c0_i32_1 : i32, i32, i32
  }
  func.func @transform_1(%arg0: i32) -> (i32, i32, i32) {
    %c0_i32 = arith.constant 0 : i32
    %c0_i32_0 = arith.constant 0 : i32
    %c0_i32_1 = arith.constant 0 : i32
    return %arg0, %c0_i32, %c0_i32_0 : i32, i32, i32
  }
  func.func @transform_2(%arg0: i32) -> (i32, i32) {
    %c0_i32 = arith.constant 0 : i32
    %c0_i32_0 = arith.constant 0 : i32
    return %arg0, %c0_i32 : i32, i32
  }
}

</mosaic_0001>

<llo_original>
// kernel: ctgwp_forward.1
$region0: #{ctgwp_forward.1}
  #allocation0 [shape = 'u32[]', space=smem, size = 0x4, offset = 0x4, fixed_abs, tag = 'smem constant byte address 0x4 - core index']
  #allocation1 [shape = 'u32[144,128]{1,0:T(1,128)}', space=vmem, size = 0x12000, scoped, tag = 'internal scratch']
  %s0 = inlined_call_operand.vmem [shape: f32[1,1,8], index: 0, kind: input, shape index: {}]
  %s1 = inlined_call_operand.vmem [shape: f32[1,128,8], index: 1, kind: input, shape index: {}]
  %s2 = inlined_call_operand.vmem [shape: f32[1,128], index: 2, kind: output, shape index: {}]
  %s3 = sld [smem:[#allocation0]]
  $region18: #{ctgwp_forward.1} parent=0
    _
  %s5 = ssub.s32 1, %s3
  %s6 = scalar_select 0, %s5, %s3
  // Predicated region
  $region2: #{ctgwp_forward.1} parent=0 // pred_check
    _
  $region3: #{ctgwp_forward.1} parent=0 // pred_check_branch
    %8 = sbr.rel (0) target = $region5
  $region4: #{ctgwp_forward.1} parent=0 // pred_region
    _
  $region5: #{ctgwp_forward.1} parent=0 // pred_fallthru
    _
  // Predicated region
  $region6: #{ctgwp_forward.1} parent=0 // pred_check
    _
  $region7: #{ctgwp_forward.1} parent=0 // pred_check_branch
    %10 = sbr.rel (0) target = $region9
  $region8: #{ctgwp_forward.1} parent=0 // pred_region
    _
  $region9: #{ctgwp_forward.1} parent=0 // pred_fallthru
    _
  %v11 = vld [vmem:[%s1] sm:$0xff]
  %v12 = vld [vmem:[%s1 + $0x8] sm:$0xff]
  %v13 = vld [vmem:[%s1 + $0x10] sm:$0xff]
  %v14 = vld [vmem:[%s1 + $0x18] sm:$0xff]
  %v15 = vld [vmem:[%s1 + $0x20] sm:$0xff]
  %v16 = vld [vmem:[%s1 + $0x28] sm:$0xff]
  %v17 = vld [vmem:[%s1 + $0x30] sm:$0xff]
  %v18 = vld [vmem:[%s1 + $0x38] sm:$0xff]
  %v19 = vld [vmem:[%s1 + $0x40] sm:$0xff]
  %v20 = vld [vmem:[%s1 + $0x48] sm:$0xff]
  %v21 = vld [vmem:[%s1 + $0x50] sm:$0xff]
  %v22 = vld [vmem:[%s1 + $0x58] sm:$0xff]
  %v23 = vld [vmem:[%s1 + $0x60] sm:$0xff]
  %v24 = vld [vmem:[%s1 + $0x68] sm:$0xff]
  %v25 = vld [vmem:[%s1 + $0x70] sm:$0xff]
  %v26 = vld [vmem:[%s1 + $0x78] sm:$0xff]
  %v27 = vld [vmem:[%s0] sm:$0x1]
  %v29 = vlaneseq
  %v30 = vshrl.u32 %v29, 7
  %v31 = vsub.s32 0, %v30
  %v32 = vrot.slane %v27, %v31
  %v34 = vmul.f32 %v11, %v32
  %v35 = vmul.f32 %v12, %v32
  %v36 = vmul.f32 %v13, %v32
  %v37 = vmul.f32 %v14, %v32
  %v38 = vmul.f32 %v15, %v32
  %v39 = vmul.f32 %v16, %v32
  %v40 = vmul.f32 %v17, %v32
  %v41 = vmul.f32 %v18, %v32
  %v42 = vmul.f32 %v19, %v32
  %v43 = vmul.f32 %v20, %v32
  %v44 = vmul.f32 %v21, %v32
  %v45 = vmul.f32 %v22, %v32
  %v46 = vmul.f32 %v23, %v32
  %v47 = vmul.f32 %v24, %v32
  %v48 = vmul.f32 %v25, %v32
  %v49 = vmul.f32 %v26, %v32
  %vm50 = vcmask 64512
  %v51 = vsel %vm50, %v34, 0.0
  %52 = vadd.xlane.f32.xlu0 %v51
  %v53 = vpop.xlane.xlu0 %52
  %v54 = vsel %vm50, %v35, 0.0
  %55 = vadd.xlane.f32.xlu0 %v54
  %v56 = vpop.xlane.xlu0 %55
  %v57 = vsel %vm50, %v36, 0.0
  %58 = vadd.xlane.f32.xlu0 %v57
  %v59 = vpop.xlane.xlu0 %58
  %v60 = vsel %vm50, %v37, 0.0
  %61 = vadd.xlane.f32.xlu0 %v60
  %v62 = vpop.xlane.xlu0 %61
  %v63 = vsel %vm50, %v38, 0.0
  %64 = vadd.xlane.f32.xlu0 %v63
  %v65 = vpop.xlane.xlu0 %64
  %v66 = vsel %vm50, %v39, 0.0
  %67 = vadd.xlane.f32.xlu0 %v66
  %v68 = vpop.xlane.xlu0 %67
  %v69 = vsel %vm50, %v40, 0.0
  %70 = vadd.xlane.f32.xlu0 %v69
  %v71 = vpop.xlane.xlu0 %70
  %v72 = vsel %vm50, %v41, 0.0
  %73 = vadd.xlane.f32.xlu0 %v72
  %v74 = vpop.xlane.xlu0 %73
  %v75 = vsel %vm50, %v42, 0.0
  %76 = vadd.xlane.f32.xlu0 %v75
  %v77 = vpop.xlane.xlu0 %76
  %v78 = vsel %vm50, %v43, 0.0
  %79 = vadd.xlane.f32.xlu0 %v78
  %v80 = vpop.xlane.xlu0 %79
  %v81 = vsel %vm50, %v44, 0.0
  %82 = vadd.xlane.f32.xlu0 %v81
  %v83 = vpop.xlane.xlu0 %82
  %v84 = vsel %vm50, %v45, 0.0
  %85 = vadd.xlane.f32.xlu0 %v84
  %v86 = vpop.xlane.xlu0 %85
  %v87 = vsel %vm50, %v46, 0.0
  %88 = vadd.xlane.f32.xlu0 %v87
  %v89 = vpop.xlane.xlu0 %88
  %v90 = vsel %vm50, %v47, 0.0
  %91 = vadd.xlane.f32.xlu0 %v90
  %v92 = vpop.xlane.xlu0 %91
  %v93 = vsel %vm50, %v48, 0.0
  %94 = vadd.xlane.f32.xlu0 %v93
  %v95 = vpop.xlane.xlu0 %94
  %v96 = vsel %vm50, %v49, 0.0
  %97 = vadd.xlane.f32.xlu0 %v96
  %v98 = vpop.xlane.xlu0 %97
  %v115 = vlaneseq
  %v116 = vand.u32 %v115, 127
  %v117 = vlaneseq
  %v118 = vshrl.u32 %v117, 7
  %v119 = vsub.s32 %v116, %v118
  %v120 = vrot.slane %v53, %v119
  %v121 = vadd.s32 %v116, 4294967288
  %v122 = vlaneseq
  %v123 = vshrl.u32 %v122, 7
  %v124 = vsub.s32 %v121, %v123
  %v125 = vrot.slane %v56, %v124
  %vm126 = vcmask 130112
  %v127 = vsel %vm126, %v125, %v120
  %v128 = vadd.s32 %v116, 4294967280
  %v129 = vlaneseq
  %v130 = vshrl.u32 %v129, 7
  %v131 = vsub.s32 %v128, %v130
  %v132 = vrot.slane %v59, %v131
  %vm133 = vcmask 195712
  %v134 = vsel %vm133, %v132, %v127
  %v135 = vadd.s32 %v116, 4294967272
  %v136 = vlaneseq
  %v137 = vshrl.u32 %v136, 7
  %v138 = vsub.s32 %v135, %v137
  %v139 = vrot.slane %v62, %v138
  %vm140 = vcmask 261312
  %v141 = vsel %vm140, %v139, %v134
  %v142 = vadd.s32 %v116, 4294967264
  %v143 = vlaneseq
  %v144 = vshrl.u32 %v143, 7
  %v145 = vsub.s32 %v142, %v144
  %v146 = vrot.slane %v65, %v145
  %vm147 = vcmask 326912
  %v148 = vsel %vm147, %v146, %v141
  %v149 = vadd.s32 %v116, 4294967256
  %v150 = vlaneseq
  %v151 = vshrl.u32 %v150, 7
  %v152 = vsub.s32 %v149, %v151
  %v153 = vrot.slane %v68, %v152
  %vm154 = vcmask 392512
  %v155 = vsel %vm154, %v153, %v148
  %v156 = vadd.s32 %v116, 4294967248
  %v157 = vlaneseq
  %v158 = vshrl.u32 %v157, 7
  %v159 = vsub.s32 %v156, %v158
  %v160 = vrot.slane %v71, %v159
  %vm161 = vcmask 458112
  %v162 = vsel %vm161, %v160, %v155
  %v163 = vadd.s32 %v116, 4294967240
  %v164 = vlaneseq
  %v165 = vshrl.u32 %v164, 7
  %v166 = vsub.s32 %v163, %v165
  %v167 = vrot.slane %v74, %v166
  %vm168 = vcmask 523712
  %v169 = vsel %vm168, %v167, %v162
  %v170 = vadd.s32 %v116, 4294967232
  %v171 = vlaneseq
  %v172 = vshrl.u32 %v171, 7
  %v173 = vsub.s32 %v170, %v172
  %v174 = vrot.slane %v77, %v173
  %vm175 = vcmask 589312
  %v176 = vsel %vm175, %v174, %v169
  %v177 = vadd.s32 %v116, 4294967224
  %v178 = vlaneseq
  %v179 = vshrl.u32 %v178, 7
  %v180 = vsub.s32 %v177, %v179
  %v181 = vrot.slane %v80, %v180
  %vm182 = vcmask 654912
  %v183 = vsel %vm182, %v181, %v176
  %v184 = vadd.s32 %v116, 4294967216
  %v185 = vlaneseq
  %v186 = vshrl.u32 %v185, 7
  %v187 = vsub.s32 %v184, %v186
  %v188 = vrot.slane %v83, %v187
  %vm189 = vcmask 720512
  %v190 = vsel %vm189, %v188, %v183
  %v191 = vadd.s32 %v116, 4294967208
  %v192 = vlaneseq
  %v193 = vshrl.u32 %v192, 7
  %v194 = vsub.s32 %v191, %v193
  %v195 = vrot.slane %v86, %v194
  %vm196 = vcmask 786112
  %v197 = vsel %vm196, %v195, %v190
  %v198 = vadd.s32 %v116, 4294967200
  %v199 = vlaneseq
  %v200 = vshrl.u32 %v199, 7
  %v201 = vsub.s32 %v198, %v200
  %v202 = vrot.slane %v89, %v201
  %vm203 = vcmask 851712
  %v204 = vsel %vm203, %v202, %v197
  %v205 = vadd.s32 %v116, 4294967192
  %v206 = vlaneseq
  %v207 = vshrl.u32 %v206, 7
  %v208 = vsub.s32 %v205, %v207
  %v209 = vrot.slane %v92, %v208
  %vm210 = vcmask 917312
  %v211 = vsel %vm210, %v209, %v204
  %v212 = vadd.s32 %v116, 4294967184
  %v213 = vlaneseq
  %v214 = vshrl.u32 %v213, 7
  %v215 = vsub.s32 %v212, %v214
  %v216 = vrot.slane %v95, %v215
  %vm217 = vcmask 982912
  %v218 = vsel %vm217, %v216, %v211
  %v219 = vadd.s32 %v116, 4294967176
  %v220 = vlaneseq
  %v221 = vshrl.u32 %v220, 7
  %v222 = vsub.s32 %v219, %v221
  %v223 = vrot.slane %v98, %v222
  %vm224 = vcmask 1048512
  %v225 = vsel %vm224, %v223, %v218
  %227 = vst [vmem:[%s2] sm:$0x1] %v225
  // Predicated region
  $region10: #{ctgwp_forward.1} parent=0 // pred_check
    _
  $region11: #{ctgwp_forward.1} parent=0 // pred_check_branch
    %229 = sbr.rel (0) target = $region13
  $region12: #{ctgwp_forward.1} parent=0 // pred_region
    _
  $region13: #{ctgwp_forward.1} parent=0 // pred_fallthru
    _
  // Predicated region
  $region14: #{ctgwp_forward.1} parent=0 // pred_check
    _
  $region15: #{ctgwp_forward.1} parent=0 // pred_check_branch
    %231 = sbr.rel (0) target = $region17
  $region16: #{ctgwp_forward.1} parent=0 // pred_region
    _
  $region17: #{ctgwp_forward.1} parent=0 // pred_fallthru
    _

</llo_original>
